<compile_context>
chip_gen: v6e
topology: v6e:2x2x1
jax: 0.10.0
libtpu: 0.0.40
codegen_flags: <defaults>
</compile_context>

<pallas_src>
import functools

import jax
import jax.numpy as jnp
import numpy as np
from jax.experimental import pallas as pl
from jax.experimental.pallas import tpu as pltpu


def _vmem_capacity_bytes():
    """Physical VMEM per core (128 MiB v5e/v6e, 64 MiB v7x); conservative fallback."""
    try:
        info = pltpu.get_tpu_info()
        cap = int(getattr(info, "vmem_capacity_bytes", 0))
        if cap > 0:
            return cap
    except Exception:
        pass
    return 64 * 1024 * 1024


def _pick_hw_chunks(hw, max_chunk=2048, max_chunks=8):
    """Split HW into equal, lane-aligned (multiple-of-128) chunks so the f32
    upcast working set inside the kernel is chunk-sized, not block-sized."""
    if hw <= max_chunk or hw % 128 != 0:
        return 1, hw
    lanes = hw // 128
    fallback = (1, hw)
    for d in range(2, max_chunks + 1):
        if lanes % d == 0:
            if hw // d <= max_chunk:
                return d, hw // d
            fallback = (d, hw // d)
    return fallback


def _pick_batch_block(n, k, hw, itemsize, hw_chunk, vmem_cap):
    """Samples per grid step, sized against a chip-aware VMEM budget."""
    if n < 16:
        # Too small for a >=2-block split with 8-row output tiles; one block
        # (block shapes then equal the full array dims, so any N is legal).
        return n
    # ~3/8 of physical VMEM for the pipelined input buffers + f32 working set
    # (~48 MiB on v5e/v6e's 128 MiB, ~24 MiB on v7x's 64 MiB).  The pallas_call
    # below raises vmem_limit_bytes to half of physical VMEM to match.
    budget = (vmem_cap * 3) // 8
    per_sample = (4 * k * hw * itemsize        # 2 inputs x double-buffer
                  + 3 * k * hw_chunk * 4)      # f32 chunk working set (p, g, diff)
    b = budget // max(per_sample, 1)
    b = max(8, min((int(b) // 8) * 8, 1024))
    # Guarantee >= 2 grid blocks so both v7x TensorCores get work
    # (dimension_semantics=("parallel",) shards grid blocks across cores).
    ceil_half = -(-n // 2)
    half = ((ceil_half + 7) // 8) * 8
    return min(b, half)
    # TODO(synk): for extreme HW where even B=8 overflows the budget, add a
    # second "arbitrary" grid axis over HW chunks with a VMEM scratch accumulator.


def _ohkm_kernel(pred_ref, gt_ref, *rest, topk, use_target_weight,
                 hw, hw_chunk, num_hw_chunks):
    # pred_ref / gt_ref: (B, K, HW) VMEM block; optional w_ref: (B, K, 1);
    # out_ref: (B, 128) lane-dense per-sample output.
    if use_target_weight:
        w_ref, out_ref = rest
    else:
        (out_ref,) = rest

    b, k = pred_ref.shape[0], pred_ref.shape[1]

    w = None
    if use_target_weight:
        # w*(p - g) == w*p - w*g: apply the weight once to the difference.
        w = w_ref[...].astype(jnp.float32)            # (B, K, 1)

    # Per-joint spatial sum of squared error, chunked over HW so the f32
    # upcast/diff intermediates stay chunk-resident (keeps B large on v7x's
    # 64 MiB VMEM without spill).  Chunk offsets are static and lane-aligned.
    def chunk_sumsq(start):
        p = pred_ref[:, :, start:start + hw_chunk].astype(jnp.float32)
        g = gt_ref[:, :, start:start + hw_chunk].astype(jnp.float32)
        d = p - g
        if use_target_weight:
            d = d * w
        return jnp.sum(d * d, axis=-1)                # (B, K) f32

    sumsq = chunk_sumsq(0)
    for c in range(1, num_hw_chunks):
        sumsq = sumsq + chunk_sumsq(c * hw_chunk)

    joint_loss = sumsq * (1.0 / float(hw))            # (B, K), K on the lane axis

    # OHKM: sum of the top-k joint losses per sample, vectorized over the tile.
    k_dim = joint_loss.shape[1]
    col_ids = jax.lax.broadcasted_iota(jnp.int32, joint_loss.shape, 1)

    def body(_, carry):
        acc, vals = carry
        m = jnp.max(vals, axis=-1, keepdims=True)     # (B, 1)
        # First column attaining the row max: remove exactly one element per
        # iteration (top-k *sum* is invariant to tie-break order).
        idx = jnp.min(jnp.where(vals == m, col_ids, k_dim),
                      axis=-1, keepdims=True)         # (B, 1)
        acc = acc + m
        vals = jnp.where(col_ids == idx, -jnp.inf, vals)
        return acc, vals

    acc0 = jnp.zeros((b, 1), jnp.float32)
    acc, _ = jax.lax.fori_loop(0, topk, body, (acc0, joint_loss), unroll=True)

    per_sample = acc * (1.0 / float(topk))            # (B, 1)
    # Rows past N (padded tail of the last block) hold garbage but are sliced
    # off by the wrapper before the final mean, so no mask is needed here.
    out_ref[...] = jnp.broadcast_to(per_sample, out_ref.shape)


def joints_ohkm_mse_loss(output, target, target_weight, *, topk=8,
                         use_target_weight=False):
    """output/target: (N, K, H, W); target_weight: (N, K, 1). Returns scalar."""
    n, k = output.shape[0], output.shape[1]
    if k < topk:
        raise ValueError(f'topk ({topk}) should not larger than num_joints ({k}).')
    hw = output.shape[2] * output.shape[3]

    # Keep caller dtype end-to-end (bf16 heatmaps halve HBM traffic); the
    # kernel upcasts per-chunk to f32 for the accumulation.
    pred = output.reshape(n, k, hw)
    gt = target.reshape(n, k, hw)

    num_hw_chunks, hw_chunk = _pick_hw_chunks(hw)
    itemsize = jnp.dtype(pred.dtype).itemsize
    vmem_cap = _vmem_capacity_bytes()
    b = _pick_batch_block(n, k, hw, itemsize, hw_chunk, vmem_cap)
    num_blocks = -(-n // b)

    in_specs = [
        pl.BlockSpec((b, k, hw), lambda i: (i, 0, 0)),
        pl.BlockSpec((b, k, hw), lambda i: (i, 0, 0)),
    ]
    args = [pred, gt]
    if use_target_weight:
        # Only DMA the weights when they are actually used.
        in_specs.append(pl.BlockSpec((b, k, 1), lambda i: (i, 0, 0)))
        args.append(target_weight.reshape(n, k, 1).astype(jnp.float32))

    kernel = functools.partial(
        _ohkm_kernel, topk=topk, use_target_weight=use_target_weight,
        hw=hw, hw_chunk=hw_chunk, num_hw_chunks=num_hw_chunks)

    per_sample = pl.pallas_call(
        kernel,
        out_shape=jax.ShapeDtypeStruct((num_blocks * b, 128), jnp.float32),
        grid_spec=pltpu.PrefetchScalarGridSpec(
            num_scalar_prefetch=0,
            grid=(num_blocks,),
            in_specs=in_specs,
            out_specs=pl.BlockSpec((b, 128), lambda i: (i, 0)),
        ),
        compiler_params=pltpu.CompilerParams(
            dimension_semantics=("parallel",),
            # v5e default scoped VMEM is only 16 MiB; raise to half physical
            # (64 MiB on v5e/v6e, 32 MiB on v7x) to match the block budget.
            vmem_limit_bytes=vmem_cap // 2),
    )(*args)

    # ohkm_loss /= N  (tiny final reduction kept in plain JAX glue); the [:n]
    # slice drops any padded-tail rows of the last block.
    return jnp.mean(per_sample[:n, 0])


def _reference_loss(output, target, target_weight, *, topk, use_target_weight):
    n, k = output.shape[0], output.shape[1]
    pred = output.reshape(n, k, -1).astype(jnp.float32)
    gt = target.reshape(n, k, -1).astype(jnp.float32)
    if use_target_weight:
        w = target_weight.reshape(n, k, 1).astype(jnp.float32)
        pred = pred * w
        gt = gt * w
    losses = jnp.mean((pred - gt) ** 2, axis=-1)          # (N, K)
    topv, _ = jax.lax.top_k(losses, topk)                  # (N, topk)
    return jnp.mean(jnp.sum(topv, axis=-1) / topk)


if __name__ == "__main__":
    key = jax.random.PRNGKey(0)
    k1, k2, k3 = jax.random.split(key, 3)

    # Small shapes consistent with the module: num_joints (16) >= topk (8).
    N, K, H, W = 2, 16, 16, 16
    output = jax.random.normal(k1, (N, K, H, W), dtype=jnp.float32)
    target = jax.random.normal(k2, (N, K, H, W), dtype=jnp.float32)
    target_weight = jax.random.uniform(k3, (N, K, 1), dtype=jnp.float32)

    # Both module configs at the small batch (single-block path).
    for use_tw in (False, True):
        got = joints_ohkm_mse_loss(
            output, target, target_weight, topk=8, use_target_weight=use_tw)
        got = jax.block_until_ready(got)
        want = _reference_loss(
            output, target, target_weight, topk=8, use_target_weight=use_tw)
        np.testing.assert_allclose(np.asarray(got), np.asarray(want),
                                   rtol=1e-5, atol=1e-6)

    # Larger batch exercising the multi-block grid (>= 2 blocks for megacore)
    # with a padded tail (N % B != 0).
    k4, k5, k6 = jax.random.split(jax.random.PRNGKey(1), 3)
    N2 = 20
    output2 = jax.random.normal(k4, (N2, K, H, W), dtype=jnp.float32)
    target2 = jax.random.normal(k5, (N2, K, H, W), dtype=jnp.float32)
    tw2 = jax.random.uniform(k6, (N2, K, 1), dtype=jnp.float32)
    for use_tw in (False, True):
        got = jax.block_until_ready(joints_ohkm_mse_loss(
            output2, target2, tw2, topk=8, use_target_weight=use_tw))
        want = _reference_loss(output2, target2, tw2, topk=8,
                               use_target_weight=use_tw)
        np.testing.assert_allclose(np.asarray(got), np.asarray(want),
                                   rtol=1e-5, atol=1e-6)

    # Larger heatmaps exercising the chunked HW reduction path (hw=4096 -> 2 chunks).
    k7, k8, k9 = jax.random.split(jax.random.PRNGKey(2), 3)
    N3, H3, W3 = 4, 64, 64
    output3 = jax.random.normal(k7, (N3, K, H3, W3), dtype=jnp.float32)
    target3 = jax.random.normal(k8, (N3, K, H3, W3), dtype=jnp.float32)
    tw3 = jax.random.uniform(k9, (N3, K, 1), dtype=jnp.float32)
    for use_tw in (False, True):
        got = jax.block_until_ready(joints_ohkm_mse_loss(
            output3, target3, tw3, topk=8, use_target_weight=use_tw))
        want = _reference_loss(output3, target3, tw3, topk=8,
                               use_target_weight=use_tw)
        np.testing.assert_allclose(np.asarray(got), np.asarray(want),
                                   rtol=1e-5, atol=1e-6)

    # bf16 heatmaps (halved HBM traffic on the bandwidth-bound path): the
    # kernel upcasts per-chunk to f32 internally.
    out_bf = output2.astype(jnp.bfloat16)
    tgt_bf = target2.astype(jnp.bfloat16)
    got = jax.block_until_ready(joints_ohkm_mse_loss(
        out_bf, tgt_bf, tw2, topk=8, use_target_weight=False))
    want = _reference_loss(out_bf, tgt_bf, tw2, topk=8, use_target_weight=False)
    np.testing.assert_allclose(np.asarray(got), np.asarray(want),
                               rtol=1e-4, atol=1e-5)

    print("KERNEL_OK")
</pallas_src>

<mosaic_0001>
module attributes {stable_mosaic.version = 11 : i64} {
  func.func @_ohkm_kernel(%arg0: i32, %arg1: memref<2x16x256xf32, #tpu.memory_space<vmem>>, %arg2: memref<2x16x256xf32, #tpu.memory_space<vmem>>, %arg3: memref<2x128xf32, #tpu.memory_space<vmem>>) attributes {dimension_semantics = [#tpu.dimension_semantics<parallel>], iteration_bounds = array<i64: 1>, scalar_prefetch = 0 : i64, scratch_operands = 0 : i64, tpu.core_type = #tpu.core_type<tc>, window_params = [{transform_indices = @transform_0, window_bounds = array<i64: 2, 16, 256>}, {transform_indices = @transform_1, window_bounds = array<i64: 2, 16, 256>}, {transform_indices = @transform_2, window_bounds = array<i64: 2, 128>}]} {
    %c0 = arith.constant 0 : index
    %c0_0 = arith.constant 0 : index
    %c0_1 = arith.constant 0 : index
    %0 = vector.load %arg1[%c0, %c0_0, %c0_1] : memref<2x16x256xf32, #tpu.memory_space<vmem>>, vector<2x16x256xf32>
    %c0_2 = arith.constant 0 : index
    %c0_3 = arith.constant 0 : index
    %c0_4 = arith.constant 0 : index
    %1 = vector.load %arg2[%c0_2, %c0_3, %c0_4] : memref<2x16x256xf32, #tpu.memory_space<vmem>>, vector<2x16x256xf32>
    %2 = arith.subf %0, %1 : vector<2x16x256xf32>
    %3 = arith.mulf %2, %2 : vector<2x16x256xf32>
    %cst = arith.constant dense<0.000000e+00> : vector<2x16xf32>
    %4 = vector.multi_reduction <add>, %3, %cst [2] : vector<2x16x256xf32> to vector<2x16xf32>
    %cst_5 = arith.constant 3.906250e-03 : f32
    %5 = vector.broadcast %cst_5 : f32 to vector<2x16xf32>
    %6 = arith.mulf %4, %5 : vector<2x16xf32>
    %7 = tpu.iota {dimensions = array<i32: 1>} : vector<2x16xi32>
    %cst_6 = arith.constant 0.000000e+00 : f32
    %8 = vector.broadcast %cst_6 : f32 to vector<2x1xf32>
    %c0_i32 = arith.constant 0 : i32
    %cst_7 = arith.constant dense<0xFF800000> : vector<2xf32>
    %9 = vector.multi_reduction <maximumf>, %6, %cst_7 [1] : vector<2x16xf32> to vector<2xf32>
    %10 = vector.shape_cast %9 : vector<2xf32> to vector<2x1xf32>
    %11 = vector.broadcast %10 : vector<2x1xf32> to vector<2x16xf32>
    %12 = arith.cmpf oeq, %6, %11 : vector<2x16xf32>
    %c16_i32 = arith.constant 16 : i32
    %13 = vector.broadcast %c16_i32 : i32 to vector<2x16xi32>
    %14 = arith.select %12, %7, %13 : vector<2x16xi1>, vector<2x16xi32>
    %cst_8 = arith.constant dense<2147483647> : vector<2xi32>
    %15 = vector.multi_reduction <minsi>, %14, %cst_8 [1] : vector<2x16xi32> to vector<2xi32>
    %16 = vector.shape_cast %15 : vector<2xi32> to vector<2x1xi32>
    %17 = arith.addf %8, %10 : vector<2x1xf32>
    %18 = vector.broadcast %16 : vector<2x1xi32> to vector<2x16xi32>
    %19 = arith.cmpi eq, %7, %18 : vector<2x16xi32>
    %cst_9 = arith.constant 0xFF800000 : f32
    %20 = vector.broadcast %cst_9 : f32 to vector<2x16xf32>
    %21 = arith.select %19, %20, %6 : vector<2x16xi1>, vector<2x16xf32>
    %c1_i32 = arith.constant 1 : i32
    %cst_10 = arith.constant dense<0xFF800000> : vector<2xf32>
    %22 = vector.multi_reduction <maximumf>, %21, %cst_10 [1] : vector<2x16xf32> to vector<2xf32>
    %23 = vector.shape_cast %22 : vector<2xf32> to vector<2x1xf32>
    %24 = vector.broadcast %23 : vector<2x1xf32> to vector<2x16xf32>
    %25 = arith.cmpf oeq, %21, %24 : vector<2x16xf32>
    %c16_i32_11 = arith.constant 16 : i32
    %26 = vector.broadcast %c16_i32_11 : i32 to vector<2x16xi32>
    %27 = arith.select %25, %7, %26 : vector<2x16xi1>, vector<2x16xi32>
    %cst_12 = arith.constant dense<2147483647> : vector<2xi32>
    %28 = vector.multi_reduction <minsi>, %27, %cst_12 [1] : vector<2x16xi32> to vector<2xi32>
    %29 = vector.shape_cast %28 : vector<2xi32> to vector<2x1xi32>
    %30 = arith.addf %17, %23 : vector<2x1xf32>
    %31 = vector.broadcast %29 : vector<2x1xi32> to vector<2x16xi32>
    %32 = arith.cmpi eq, %7, %31 : vector<2x16xi32>
    %cst_13 = arith.constant 0xFF800000 : f32
    %33 = vector.broadcast %cst_13 : f32 to vector<2x16xf32>
    %34 = arith.select %32, %33, %21 : vector<2x16xi1>, vector<2x16xf32>
    %c2_i32 = arith.constant 2 : i32
    %cst_14 = arith.constant dense<0xFF800000> : vector<2xf32>
    %35 = vector.multi_reduction <maximumf>, %34, %cst_14 [1] : vector<2x16xf32> to vector<2xf32>
    %36 = vector.shape_cast %35 : vector<2xf32> to vector<2x1xf32>
    %37 = vector.broadcast %36 : vector<2x1xf32> to vector<2x16xf32>
    %38 = arith.cmpf oeq, %34, %37 : vector<2x16xf32>
    %c16_i32_15 = arith.constant 16 : i32
    %39 = vector.broadcast %c16_i32_15 : i32 to vector<2x16xi32>
    %40 = arith.select %38, %7, %39 : vector<2x16xi1>, vector<2x16xi32>
    %cst_16 = arith.constant dense<2147483647> : vector<2xi32>
    %41 = vector.multi_reduction <minsi>, %40, %cst_16 [1] : vector<2x16xi32> to vector<2xi32>
    %42 = vector.shape_cast %41 : vector<2xi32> to vector<2x1xi32>
    %43 = arith.addf %30, %36 : vector<2x1xf32>
    %44 = vector.broadcast %42 : vector<2x1xi32> to vector<2x16xi32>
    %45 = arith.cmpi eq, %7, %44 : vector<2x16xi32>
    %cst_17 = arith.constant 0xFF800000 : f32
    %46 = vector.broadcast %cst_17 : f32 to vector<2x16xf32>
    %47 = arith.select %45, %46, %34 : vector<2x16xi1>, vector<2x16xf32>
    %c3_i32 = arith.constant 3 : i32
    %cst_18 = arith.constant dense<0xFF800000> : vector<2xf32>
    %48 = vector.multi_reduction <maximumf>, %47, %cst_18 [1] : vector<2x16xf32> to vector<2xf32>
    %49 = vector.shape_cast %48 : vector<2xf32> to vector<2x1xf32>
    %50 = vector.broadcast %49 : vector<2x1xf32> to vector<2x16xf32>
    %51 = arith.cmpf oeq, %47, %50 : vector<2x16xf32>
    %c16_i32_19 = arith.constant 16 : i32
    %52 = vector.broadcast %c16_i32_19 : i32 to vector<2x16xi32>
    %53 = arith.select %51, %7, %52 : vector<2x16xi1>, vector<2x16xi32>
    %cst_20 = arith.constant dense<2147483647> : vector<2xi32>
    %54 = vector.multi_reduction <minsi>, %53, %cst_20 [1] : vector<2x16xi32> to vector<2xi32>
    %55 = vector.shape_cast %54 : vector<2xi32> to vector<2x1xi32>
    %56 = arith.addf %43, %49 : vector<2x1xf32>
    %57 = vector.broadcast %55 : vector<2x1xi32> to vector<2x16xi32>
    %58 = arith.cmpi eq, %7, %57 : vector<2x16xi32>
    %cst_21 = arith.constant 0xFF800000 : f32
    %59 = vector.broadcast %cst_21 : f32 to vector<2x16xf32>
    %60 = arith.select %58, %59, %47 : vector<2x16xi1>, vector<2x16xf32>
    %c4_i32 = arith.constant 4 : i32
    %cst_22 = arith.constant dense<0xFF800000> : vector<2xf32>
    %61 = vector.multi_reduction <maximumf>, %60, %cst_22 [1] : vector<2x16xf32> to vector<2xf32>
    %62 = vector.shape_cast %61 : vector<2xf32> to vector<2x1xf32>
    %63 = vector.broadcast %62 : vector<2x1xf32> to vector<2x16xf32>
    %64 = arith.cmpf oeq, %60, %63 : vector<2x16xf32>
    %c16_i32_23 = arith.constant 16 : i32
    %65 = vector.broadcast %c16_i32_23 : i32 to vector<2x16xi32>
    %66 = arith.select %64, %7, %65 : vector<2x16xi1>, vector<2x16xi32>
    %cst_24 = arith.constant dense<2147483647> : vector<2xi32>
    %67 = vector.multi_reduction <minsi>, %66, %cst_24 [1] : vector<2x16xi32> to vector<2xi32>
    %68 = vector.shape_cast %67 : vector<2xi32> to vector<2x1xi32>
    %69 = arith.addf %56, %62 : vector<2x1xf32>
    %70 = vector.broadcast %68 : vector<2x1xi32> to vector<2x16xi32>
    %71 = arith.cmpi eq, %7, %70 : vector<2x16xi32>
    %cst_25 = arith.constant 0xFF800000 : f32
    %72 = vector.broadcast %cst_25 : f32 to vector<2x16xf32>
    %73 = arith.select %71, %72, %60 : vector<2x16xi1>, vector<2x16xf32>
    %c5_i32 = arith.constant 5 : i32
    %cst_26 = arith.constant dense<0xFF800000> : vector<2xf32>
    %74 = vector.multi_reduction <maximumf>, %73, %cst_26 [1] : vector<2x16xf32> to vector<2xf32>
    %75 = vector.shape_cast %74 : vector<2xf32> to vector<2x1xf32>
    %76 = vector.broadcast %75 : vector<2x1xf32> to vector<2x16xf32>
    %77 = arith.cmpf oeq, %73, %76 : vector<2x16xf32>
    %c16_i32_27 = arith.constant 16 : i32
    %78 = vector.broadcast %c16_i32_27 : i32 to vector<2x16xi32>
    %79 = arith.select %77, %7, %78 : vector<2x16xi1>, vector<2x16xi32>
    %cst_28 = arith.constant dense<2147483647> : vector<2xi32>
    %80 = vector.multi_reduction <minsi>, %79, %cst_28 [1] : vector<2x16xi32> to vector<2xi32>
    %81 = vector.shape_cast %80 : vector<2xi32> to vector<2x1xi32>
    %82 = arith.addf %69, %75 : vector<2x1xf32>
    %83 = vector.broadcast %81 : vector<2x1xi32> to vector<2x16xi32>
    %84 = arith.cmpi eq, %7, %83 : vector<2x16xi32>
    %cst_29 = arith.constant 0xFF800000 : f32
    %85 = vector.broadcast %cst_29 : f32 to vector<2x16xf32>
    %86 = arith.select %84, %85, %73 : vector<2x16xi1>, vector<2x16xf32>
    %c6_i32 = arith.constant 6 : i32
    %cst_30 = arith.constant dense<0xFF800000> : vector<2xf32>
    %87 = vector.multi_reduction <maximumf>, %86, %cst_30 [1] : vector<2x16xf32> to vector<2xf32>
    %88 = vector.shape_cast %87 : vector<2xf32> to vector<2x1xf32>
    %89 = vector.broadcast %88 : vector<2x1xf32> to vector<2x16xf32>
    %90 = arith.cmpf oeq, %86, %89 : vector<2x16xf32>
    %c16_i32_31 = arith.constant 16 : i32
    %91 = vector.broadcast %c16_i32_31 : i32 to vector<2x16xi32>
    %92 = arith.select %90, %7, %91 : vector<2x16xi1>, vector<2x16xi32>
    %cst_32 = arith.constant dense<2147483647> : vector<2xi32>
    %93 = vector.multi_reduction <minsi>, %92, %cst_32 [1] : vector<2x16xi32> to vector<2xi32>
    %94 = vector.shape_cast %93 : vector<2xi32> to vector<2x1xi32>
    %95 = arith.addf %82, %88 : vector<2x1xf32>
    %96 = vector.broadcast %94 : vector<2x1xi32> to vector<2x16xi32>
    %97 = arith.cmpi eq, %7, %96 : vector<2x16xi32>
    %cst_33 = arith.constant 0xFF800000 : f32
    %98 = vector.broadcast %cst_33 : f32 to vector<2x16xf32>
    %99 = arith.select %97, %98, %86 : vector<2x16xi1>, vector<2x16xf32>
    %c7_i32 = arith.constant 7 : i32
    %cst_34 = arith.constant dense<0xFF800000> : vector<2xf32>
    %100 = vector.multi_reduction <maximumf>, %99, %cst_34 [1] : vector<2x16xf32> to vector<2xf32>
    %101 = vector.shape_cast %100 : vector<2xf32> to vector<2x1xf32>
    %102 = vector.broadcast %101 : vector<2x1xf32> to vector<2x16xf32>
    %103 = arith.cmpf oeq, %99, %102 : vector<2x16xf32>
    %c16_i32_35 = arith.constant 16 : i32
    %104 = vector.broadcast %c16_i32_35 : i32 to vector<2x16xi32>
    %105 = arith.select %103, %7, %104 : vector<2x16xi1>, vector<2x16xi32>
    %cst_36 = arith.constant dense<2147483647> : vector<2xi32>
    %106 = vector.multi_reduction <minsi>, %105, %cst_36 [1] : vector<2x16xi32> to vector<2xi32>
    %107 = vector.shape_cast %106 : vector<2xi32> to vector<2x1xi32>
    %108 = arith.addf %95, %101 : vector<2x1xf32>
    %109 = vector.broadcast %107 : vector<2x1xi32> to vector<2x16xi32>
    %110 = arith.cmpi eq, %7, %109 : vector<2x16xi32>
    %cst_37 = arith.constant 0xFF800000 : f32
    %111 = vector.broadcast %cst_37 : f32 to vector<2x16xf32>
    %112 = arith.select %110, %111, %99 : vector<2x16xi1>, vector<2x16xf32>
    %cst_38 = arith.constant 1.250000e-01 : f32
    %113 = vector.broadcast %cst_38 : f32 to vector<2x1xf32>
    %114 = arith.mulf %108, %113 : vector<2x1xf32>
    %115 = vector.shape_cast %114 : vector<2x1xf32> to vector<2x1xf32>
    %116 = vector.broadcast %115 : vector<2x1xf32> to vector<2x128xf32>
    %c0_39 = arith.constant 0 : index
    %c0_40 = arith.constant 0 : index
    %117 = vector.load %arg3[%c0_39, %c0_40] : memref<2x128xf32, #tpu.memory_space<vmem>>, vector<2x128xf32>
    tpu.vector_store %arg3[%c0_39, %c0_40], %116 {strides = array<i32>} : memref<2x128xf32, #tpu.memory_space<vmem>>, vector<2x128xf32>,
    return
  }
  func.func @transform_0(%arg0: i32) -> (i32, i32, i32) {
    %c0_i32 = arith.constant 0 : i32
    %c0_i32_0 = arith.constant 0 : i32
    %c0_i32_1 = arith.constant 0 : i32
    return %arg0, %c0_i32, %c0_i32_0 : i32, i32, i32
  }
  func.func @transform_1(%arg0: i32) -> (i32, i32, i32) {
    %c0_i32 = arith.constant 0 : i32
    %c0_i32_0 = arith.constant 0 : i32
    %c0_i32_1 = arith.constant 0 : i32
    return %arg0, %c0_i32, %c0_i32_0 : i32, i32, i32
  }
  func.func @transform_2(%arg0: i32) -> (i32, i32) {
    %c0_i32 = arith.constant 0 : i32
    %c0_i32_0 = arith.constant 0 : i32
    return %arg0, %c0_i32 : i32, i32
  }
}

</mosaic_0001>

<llo_original>
// kernel: tpu_custom_call.1
$region0: #{tpu_custom_call.1}
  #allocation0 [shape = 'u32[]', space=smem, size = 0x4, offset = 0x4, fixed_abs, tag = 'smem constant byte address 0x4 - core index']
  #allocation1 [shape = 'u32[144,128]{1,0:T(1,128)}', space=vmem, size = 0x12000, scoped, tag = 'internal scratch']
  %s0 = inlined_call_operand.hbm [shape: f32[2,16,256], index: 0, kind: input, shape index: {}]
  %s1 = inlined_call_operand.hbm [shape: f32[2,16,256], index: 1, kind: input, shape index: {}]
  %s2 = inlined_call_operand.hbm [shape: f32[2,128], index: 2, kind: output, shape index: {}]
  %s3 = sld [smem:[#allocation0]]
  $region26: #{tpu_custom_call.1} parent=0
    _
  %s5 = ssub.s32 1, %s3
  %s6 = scalar_select 0, %s5, %s3
  $region1: #{tpu_custom_call.1} parent=0
    #allocation2 [shape = 'u8[32768]{0}', space=vmem, size = 0x8000, scoped, tag = 'input window, operand 0, single buffered']
    #allocation3 [shape = 's32[1]{0}', space=sflag, size = 0x4, scoped, tag = 'scoped memory for tpu_custom_call.1']
    #allocation4 [shape = 's32[1]{0}', space=sflag, size = 0x4, scoped, tag = 'scoped memory for tpu_custom_call.1']
    #allocation5 [shape = 'u8[32768]{0}', space=vmem, size = 0x8000, scoped, tag = 'input window, operand 1, single buffered']
    #allocation6 [shape = 's32[1]{0}', space=sflag, size = 0x4, scoped, tag = 'scoped memory for tpu_custom_call.1']
    #allocation7 [shape = 'u8[1024]{0}', space=vmem, size = 0x400, scoped, tag = 'output window, operand 0, single buffered']
    %7 = vsyncpa [#allocation3], 0
    %8 = vsyncpa [#allocation6], 0
    %9 = vsyncpa [#allocation4], 0
    // Predicated region
    $region2: #{tpu_custom_call.1} parent=1 // pred_check
      _
    $region3: #{tpu_custom_call.1} parent=1 // pred_check_branch
      %11 = sbr.rel (0) target = $region5
    $region4: #{tpu_custom_call.1} parent=1 // pred_region
      %s13 = ssub.s32 1024, 1024
      %14 = vsyncadd [#allocation3], %s13
      %s15 = sshll.u32 [#allocation2], 4
      %s16 = int_to_ptr.vmem [resolvable:$true] %s15
      %21 = dma.hbm_to_vmem [thread:$0]  %s0, 1024, %s16, [#allocation3], 256, 256, 16
    $region5: #{tpu_custom_call.1} parent=1 // pred_fallthru
      _
    // Predicated region
    $region6: #{tpu_custom_call.1} parent=1 // pred_check
      _
    $region7: #{tpu_custom_call.1} parent=1 // pred_check_branch
      %23 = sbr.rel (0) target = $region9
    $region8: #{tpu_custom_call.1} parent=1 // pred_region
      %s25 = ssub.s32 1024, 1024
      %26 = vsyncadd [#allocation6], %s25
      %s27 = sshll.u32 [#allocation5], 4
      %s28 = int_to_ptr.vmem [resolvable:$true] %s27
      %33 = dma.hbm_to_vmem [thread:$0]  %s1, 1024, %s28, [#allocation6], 256, 256, 16
    $region9: #{tpu_custom_call.1} parent=1 // pred_fallthru
      _
    // Predicated region
    $region10: #{tpu_custom_call.1} parent=1 // pred_check
      _
    $region11: #{tpu_custom_call.1} parent=1 // pred_check_branch
      %35 = sbr.rel (0) target = $region13
    $region12: #{tpu_custom_call.1} parent=1 // pred_region
      %36 = dma.done [#allocation3], 1024
    $region13: #{tpu_custom_call.1} parent=1 // pred_fallthru
      _
    // Predicated region
    $region14: #{tpu_custom_call.1} parent=1 // pred_check
      _
    $region15: #{tpu_custom_call.1} parent=1 // pred_check_branch
      %38 = sbr.rel (0) target = $region17
    $region16: #{tpu_custom_call.1} parent=1 // pred_region
      %39 = dma.done [#allocation6], 1024
    $region17: #{tpu_custom_call.1} parent=1 // pred_fallthru
      _
    %v40 = vld [vmem:[#allocation2] sm:$0xff]
    %v41 = vld [vmem:[#allocation2 + $0x8] sm:$0xff]
    %v42 = vld [vmem:[#allocation2 + $0x10] sm:$0xff]
    %v43 = vld [vmem:[#allocation2 + $0x18] sm:$0xff]
    %v44 = vld [vmem:[#allocation2 + $0x20] sm:$0xff]
    %v45 = vld [vmem:[#allocation2 + $0x28] sm:$0xff]
    %v46 = vld [vmem:[#allocation2 + $0x30] sm:$0xff]
    %v47 = vld [vmem:[#allocation2 + $0x38] sm:$0xff]
    %v48 = vld [vmem:[#allocation5] sm:$0xff]
    %v49 = vld [vmem:[#allocation5 + $0x8] sm:$0xff]
    %v50 = vld [vmem:[#allocation5 + $0x10] sm:$0xff]
    %v51 = vld [vmem:[#allocation5 + $0x18] sm:$0xff]
    %v52 = vld [vmem:[#allocation5 + $0x20] sm:$0xff]
    %v53 = vld [vmem:[#allocation5 + $0x28] sm:$0xff]
    %v54 = vld [vmem:[#allocation5 + $0x30] sm:$0xff]
    %v55 = vld [vmem:[#allocation5 + $0x38] sm:$0xff]
    %v56 = vsub.f32 %v40, %v48
    %v57 = vsub.f32 %v41, %v49
    %v58 = vsub.f32 %v42, %v50
    %v59 = vsub.f32 %v43, %v51
    %v60 = vsub.f32 %v44, %v52
    %v61 = vsub.f32 %v45, %v53
    %v62 = vsub.f32 %v46, %v54
    %v63 = vsub.f32 %v47, %v55
    %v64 = vmul.f32 %v56, %v56
    %v65 = vmul.f32 %v57, %v57
    %v66 = vmul.f32 %v58, %v58
    %v67 = vmul.f32 %v59, %v59
    %v68 = vmul.f32 %v60, %v60
    %v69 = vmul.f32 %v61, %v61
    %v70 = vmul.f32 %v62, %v62
    %v71 = vmul.f32 %v63, %v63
    %v72 = vadd.f32 %v64, %v65
    %73 = vadd.xlane.f32.xlu0 %v72
    %v74 = vpop.xlane.xlu0 %73
    %v75 = vadd.f32 %v66, %v67
    %76 = vadd.xlane.f32.xlu0 %v75
    %v77 = vpop.xlane.xlu0 %76
    %v78 = vadd.f32 %v68, %v69
    %79 = vadd.xlane.f32.xlu0 %v78
    %v80 = vpop.xlane.xlu0 %79
    %v81 = vadd.f32 %v70, %v71
    %82 = vadd.xlane.f32.xlu0 %v81
    %v83 = vpop.xlane.xlu0 %82
    %v84 = vmul.f32 %v74, 0.00390625
    %v85 = vmul.f32 %v77, 0.00390625
    %v86 = vmul.f32 %v80, 0.00390625
    %v87 = vmul.f32 %v83, 0.00390625
    %v88 = vlaneseq
    %v89 = vand.u32 %v88, 127
    %v94 = vlaneseq
    %v95 = vshrl.u32 %v94, 7
    %v96 = vsub.s32 %v89, %v95
    %v97 = vrot.slane %v84, %v96
    %v98 = vadd.s32 %v89, 4294967288
    %v99 = vlaneseq
    %v100 = vshrl.u32 %v99, 7
    %v101 = vsub.s32 %v98, %v100
    %v102 = vrot.slane %v85, %v101
    %vm103 = vcmask 130112
    %v104 = vsel %vm103, %v102, %v97
    %v105 = vlaneseq
    %v106 = vshrl.u32 %v105, 7
    %v107 = vsub.s32 %v89, %v106
    %v108 = vrot.slane %v86, %v107
    %v109 = vlaneseq
    %v110 = vshrl.u32 %v109, 7
    %v111 = vsub.s32 %v98, %v110
    %v112 = vrot.slane %v87, %v111
    %v113 = vsel %vm103, %v112, %v108
    %vm114 = vcmask 1041409
    %v115 = vsel %vm114, %v113, %v104
    %vm117 = vcmask 123904
    %v118 = vsel %vm117, %v115, -inf
    %119 = vmax.xlane.f32.xlu0 %v118
    %v120 = vpop.xlane.xlu0 %119
    %v122 = vlaneseq
    %v123 = vshrl.u32 %v122, 7
    %v124 = vsub.s32 0, %v123
    %v125 = vrot.slane %v120, %v124
    %v126 = vlaneseq
    %v127 = vshrl.u32 %v126, 7
    %v128 = vsub.s32 1, %v127
    %v129 = vrot.slane %v120, %v128
    %vm132 = vcmp.eq.f32.partialorder %v84, %v125
    %vm133 = vcmp.eq.f32.partialorder %v85, %v125
    %vm134 = vcmp.eq.f32.partialorder %v86, %v129
    %vm135 = vcmp.eq.f32.partialorder %v87, %v129
    %137 = vbcast.lane.b32.xlu0 %v89, 256
    %v138 = vpop.permute.xlu0 %137
    %s140 = sor.u32 256, 8
    %141 = vbcast.lane.b32.xlu0 %v89, %s140
    %v142 = vpop.permute.xlu0 %141
    %v143 = vsel %vm132, %v138, 16
    %v144 = vsel %vm133, %v142, 16
    %v145 = vsel %vm134, %v138, 16
    %v146 = vsel %vm135, %v142, 16
    %147 = vset.pattern.permute.xlu0 0
    %148 = vperm.xlu0 %147, %v143
    %v149 = vpop.permute.xlu0 %148
    %150 = vset.pattern.permute.xlu0 0
    %151 = vperm.xlu0 %150, %v144
    %v152 = vpop.permute.xlu0 %151
    %153 = vset.pattern.permute.xlu0 0
    %154 = vperm.xlu0 %153, %v145
    %v155 = vpop.permute.xlu0 %154
    %156 = vset.pattern.permute.xlu0 0
    %157 = vperm.xlu0 %156, %v146
    %v158 = vpop.permute.xlu0 %157
    %v159 = vlaneseq
    %v160 = vshrl.u32 %v159, 7
    %v161 = vsub.s32 %v89, %v160
    %v162 = vrot.slane %v149, %v161
    %v163 = vlaneseq
    %v164 = vshrl.u32 %v163, 7
    %v165 = vsub.s32 %v98, %v164
    %v166 = vrot.slane %v152, %v165
    %v167 = vsel %vm103, %v166, %v162
    %v168 = vlaneseq
    %v169 = vshrl.u32 %v168, 7
    %v170 = vsub.s32 %v89, %v169
    %v171 = vrot.slane %v155, %v170
    %v172 = vlaneseq
    %v173 = vshrl.u32 %v172, 7
    %v174 = vsub.s32 %v98, %v173
    %v175 = vrot.slane %v158, %v174
    %v176 = vsel %vm103, %v175, %v171
    %v177 = vsel %vm114, %v176, %v167
    %v178 = vsel %vm117, %v177, 2147483647
    %v179 = vand.u32 %v178, 65535
    %v180 = vshra.s32 %v178, 16
    %v181 = vcvt.s32.f32 %v179
    %v182 = vcvt.s32.f32 %v180
    %183 = vmin.xlane.f32.xlu0 %v182
    %v184 = vpop.xlane.xlu0 %183
    %vm185 = vcmp.eq.f32.partialorder %v182, %v184
    %v186 = vsel %vm185, %v181, inf
    %187 = vmin.xlane.f32.xlu0 %v186
    %v188 = vpop.xlane.xlu0 %187
    %v189 = vcvt.f32.s32 %v188
    %v190 = vcvt.f32.s32 %v184
    %v191 = vshll.u32 %v190, 16
    %v192 = vadd.s32 %v191, %v189
    %v193 = vadd.f32 %v120, 0.0
    %vm194 = vcmp.eq.s32.totalorder %v89, %v192
    %v195 = vsel %vm194, -inf, %v115
    %v196 = vsel %vm117, %v195, -inf
    %197 = vmax.xlane.f32.xlu0 %v196
    %v198 = vpop.xlane.xlu0 %197
    %vm199 = vcmp.eq.f32.partialorder %v195, %v198
    %v200 = vsel %vm199, %v89, 16
    %v201 = vsel %vm117, %v200, 2147483647
    %v202 = vand.u32 %v201, 65535
    %v203 = vshra.s32 %v201, 16
    %v204 = vcvt.s32.f32 %v202
    %v205 = vcvt.s32.f32 %v203
    %206 = vmin.xlane.f32.xlu0 %v205
    %v207 = vpop.xlane.xlu0 %206
    %vm208 = vcmp.eq.f32.partialorder %v205, %v207
    %v209 = vsel %vm208, %v204, inf
    %210 = vmin.xlane.f32.xlu0 %v209
    %v211 = vpop.xlane.xlu0 %210
    %v212 = vcvt.f32.s32 %v211
    %v213 = vcvt.f32.s32 %v207
    %v214 = vshll.u32 %v213, 16
    %v215 = vadd.s32 %v214, %v212
    %v216 = vadd.f32 %v193, %v198
    %vm217 = vcmp.eq.s32.totalorder %v89, %v215
    %v218 = vsel %vm217, -inf, %v195
    %v219 = vsel %vm117, %v218, -inf
    %220 = vmax.xlane.f32.xlu0 %v219
    %v221 = vpop.xlane.xlu0 %220
    %vm222 = vcmp.eq.f32.partialorder %v218, %v221
    %v223 = vsel %vm222, %v89, 16
    %v224 = vsel %vm117, %v223, 2147483647
    %v225 = vand.u32 %v224, 65535
    %v226 = vshra.s32 %v224, 16
    %v227 = vcvt.s32.f32 %v225
    %v228 = vcvt.s32.f32 %v226
    %229 = vmin.xlane.f32.xlu0 %v228
    %v230 = vpop.xlane.xlu0 %229
    %vm231 = vcmp.eq.f32.partialorder %v228, %v230
    %v232 = vsel %vm231, %v227, inf
    %233 = vmin.xlane.f32.xlu0 %v232
    %v234 = vpop.xlane.xlu0 %233
    %v235 = vcvt.f32.s32 %v234
    %v236 = vcvt.f32.s32 %v230
    %v237 = vshll.u32 %v236, 16
    %v238 = vadd.s32 %v237, %v235
    %v239 = vadd.f32 %v216, %v221
    %vm240 = vcmp.eq.s32.totalorder %v89, %v238
    %v241 = vsel %vm240, -inf, %v218
    %v242 = vsel %vm117, %v241, -inf
    %243 = vmax.xlane.f32.xlu0 %v242
    %v244 = vpop.xlane.xlu0 %243
    %vm245 = vcmp.eq.f32.partialorder %v241, %v244
    %v246 = vsel %vm245, %v89, 16
    %v247 = vsel %vm117, %v246, 2147483647
    %v248 = vand.u32 %v247, 65535
    %v249 = vshra.s32 %v247, 16
    %v250 = vcvt.s32.f32 %v248
    %v251 = vcvt.s32.f32 %v249
    %252 = vmin.xlane.f32.xlu0 %v251
    %v253 = vpop.xlane.xlu0 %252
    %vm254 = vcmp.eq.f32.partialorder %v251, %v253
    %v255 = vsel %vm254, %v250, inf
    %256 = vmin.xlane.f32.xlu0 %v255
    %v257 = vpop.xlane.xlu0 %256
    %v258 = vcvt.f32.s32 %v257
    %v259 = vcvt.f32.s32 %v253
    %v260 = vshll.u32 %v259, 16
    %v261 = vadd.s32 %v260, %v258
    %v262 = vadd.f32 %v239, %v244
    %vm263 = vcmp.eq.s32.totalorder %v89, %v261
    %v264 = vsel %vm263, -inf, %v241
    %v265 = vsel %vm117, %v264, -inf
    %266 = vmax.xlane.f32.xlu0 %v265
    %v267 = vpop.xlane.xlu0 %266
    %vm268 = vcmp.eq.f32.partialorder %v264, %v267
    %v269 = vsel %vm268, %v89, 16
    %v270 = vsel %vm117, %v269, 2147483647
    %v271 = vand.u32 %v270, 65535
    %v272 = vshra.s32 %v270, 16
    %v273 = vcvt.s32.f32 %v271
    %v274 = vcvt.s32.f32 %v272
    %275 = vmin.xlane.f32.xlu0 %v274
    %v276 = vpop.xlane.xlu0 %275
    %vm277 = vcmp.eq.f32.partialorder %v274, %v276
    %v278 = vsel %vm277, %v273, inf
    %279 = vmin.xlane.f32.xlu0 %v278
    %v280 = vpop.xlane.xlu0 %279
    %v281 = vcvt.f32.s32 %v280
    %v282 = vcvt.f32.s32 %v276
    %v283 = vshll.u32 %v282, 16
    %v284 = vadd.s32 %v283, %v281
    %v285 = vadd.f32 %v262, %v267
    %vm286 = vcmp.eq.s32.totalorder %v89, %v284
    %v287 = vsel %vm286, -inf, %v264
    %v288 = vsel %vm117, %v287, -inf
    %289 = vmax.xlane.f32.xlu0 %v288
    %v290 = vpop.xlane.xlu0 %289
    %vm291 = vcmp.eq.f32.partialorder %v287, %v290
    %v292 = vsel %vm291, %v89, 16
    %v293 = vsel %vm117, %v292, 2147483647
    %v294 = vand.u32 %v293, 65535
    %v295 = vshra.s32 %v293, 16
    %v296 = vcvt.s32.f32 %v294
    %v297 = vcvt.s32.f32 %v295
    %298 = vmin.xlane.f32.xlu0 %v297
    %v299 = vpop.xlane.xlu0 %298
    %vm300 = vcmp.eq.f32.partialorder %v297, %v299
    %v301 = vsel %vm300, %v296, inf
    %302 = vmin.xlane.f32.xlu0 %v301
    %v303 = vpop.xlane.xlu0 %302
    %v304 = vcvt.f32.s32 %v303
    %v305 = vcvt.f32.s32 %v299
    %v306 = vshll.u32 %v305, 16
    %v307 = vadd.s32 %v306, %v304
    %v308 = vadd.f32 %v285, %v290
    %vm309 = vcmp.eq.s32.totalorder %v89, %v307
    %v310 = vsel %vm309, -inf, %v287
    %v311 = vsel %vm117, %v310, -inf
    %312 = vmax.xlane.f32.xlu0 %v311
    %v313 = vpop.xlane.xlu0 %312
    %vm314 = vcmp.eq.f32.partialorder %v310, %v313
    %v315 = vsel %vm314, %v89, 16
    %v316 = vsel %vm117, %v315, 2147483647
    %v317 = vand.u32 %v316, 65535
    %v318 = vshra.s32 %v316, 16
    %v319 = vcvt.s32.f32 %v317
    %v320 = vcvt.s32.f32 %v318
    %321 = vmin.xlane.f32.xlu0 %v320
    %v322 = vpop.xlane.xlu0 %321
    %vm323 = vcmp.eq.f32.partialorder %v320, %v322
    %v324 = vsel %vm323, %v319, inf
    %325 = vmin.xlane.f32.xlu0 %v324
    %v326 = vpop.xlane.xlu0 %325
    %v327 = vcvt.f32.s32 %v326
    %v328 = vcvt.f32.s32 %v322
    %v329 = vshll.u32 %v328, 16
    %v330 = vadd.s32 %v329, %v327
    %v331 = vadd.f32 %v308, %v313
    %vm332 = vcmp.eq.s32.totalorder %v89, %v330
    %v333 = vsel %vm332, -inf, %v310
    %v334 = vsel %vm117, %v333, -inf
    %335 = vmax.xlane.f32.xlu0 %v334
    %v336 = vpop.xlane.xlu0 %335
    %v337 = vadd.f32 %v331, %v336
    %v338 = vmul.f32 %v337, 0.125
    %339 = vst [vmem:[#allocation7] sm:$0x3] %v338
    // Predicated region
    $region18: #{tpu_custom_call.1} parent=1 // pred_check
      _
    $region19: #{tpu_custom_call.1} parent=1 // pred_check_branch
      %341 = sbr.rel (0) target = $region21
    $region20: #{tpu_custom_call.1} parent=1 // pred_region
      %s343 = ssub.s32 32, 32
      %344 = vsyncadd [#allocation4], %s343
      %s346 = sshll.u32 [#allocation7], 4
      %s347 = int_to_ptr.vmem [resolvable:$true] %s346
      %349 = dma.vmem_to_hbm [thread:$0]  %s347, 32, %s2, [#allocation4]
    $region21: #{tpu_custom_call.1} parent=1 // pred_fallthru
      _
    // Predicated region
    $region22: #{tpu_custom_call.1} parent=1 // pred_check
      _
    $region23: #{tpu_custom_call.1} parent=1 // pred_check_branch
      %351 = sbr.rel (0) target = $region25
    $region24: #{tpu_custom_call.1} parent=1 // pred_region
      %352 = dma.done [#allocation4], 32
    $region25: #{tpu_custom_call.1} parent=1 // pred_fallthru
      _
    %353 = vsyncpa [#allocation3], 1
    %354 = vsyncpa [#allocation6], 1
    %355 = vsyncpa [#allocation4], 1

</llo_original>
